<compile_context>
chip_gen: v6e
topology: v6e:2x2x1
jax: 0.10.0
libtpu: 0.0.40
codegen_flags: <defaults>
</compile_context>

<pallas_src>
import math
import functools

import jax
import jax.numpy as jnp
from jax.experimental import pallas as pl
from jax.experimental.pallas import tpu as pltpu


# ----------------------------------------------------------------------------
# Buffer setup (mirrors PositionalEncoding.__init__)
# ----------------------------------------------------------------------------
def make_positional_encoding(d_model_orig, max_len=5000, dtype=jnp.float32):
    """Builds the `pe` buffer exactly like the PyTorch __init__."""
    d_model = 2 * (d_model_orig // 2)
    position = jnp.arange(0, max_len, dtype=jnp.float32)[:, None]             # [L, 1]
    div_term = jnp.exp(
        jnp.arange(0, d_model, 2, dtype=jnp.float32) * (-math.log(10000.0) / d_model)
    )                                                                          # [d_model/2]
    pe = jnp.zeros((max_len, d_model), dtype=jnp.float32)
    pe = pe.at[:, 0::2].set(jnp.sin(position * div_term))
    pe = pe.at[:, 1::2].set(jnp.cos(position * div_term))
    pe = pe[:, None, :]                                                        # [L, 1, d_model]
    if d_model != d_model_orig:
        # odd d_model_orig: torch concatenates one column then zeros it.
        pe = jnp.concatenate([pe, jnp.zeros((max_len, 1, 1), jnp.float32)], axis=2)
    return pe.astype(dtype)                                                    # [L, 1, d_model_orig]


# ----------------------------------------------------------------------------
# Pallas kernels (operate on lane-dense [seq_tile, B*D] blocks)
# ----------------------------------------------------------------------------
def _pe_add_kernel(x_ref, pe_ref, o_ref):
    # eval-mode forward: x + pe  (dropout is identity)
    o_ref[...] = x_ref[...] + pe_ref[...]


def _pe_add_dropout_kernel(x_ref, pe_ref, bits_ref, o_ref, *, threshold, scale):
    # training-mode forward: inverted dropout applied to (x + pe)
    y = x_ref[...] + pe_ref[...]
    keep = bits_ref[...] >= jnp.uint32(threshold)            # P(keep) = 1 - p
    o_ref[...] = jnp.where(keep,
                           y * jnp.asarray(scale, y.dtype),  # stay in input dtype
                           jnp.zeros_like(y)).astype(o_ref.dtype)


# ----------------------------------------------------------------------------
# Tiling helper
# ----------------------------------------------------------------------------
def _pick_seq_tile(S, row_bytes, target_block_bytes=2 << 20, max_rows=1024):
    """Rows per block: ~2 MiB per x block, multiple of 8 sublanes, capped."""
    rows = max(1, min(max_rows, target_block_bytes // max(row_bytes, 1)))
    if rows >= S:
        return S                      # whole (small) array in one block
    rows = max(8, (rows // 8) * 8)    # sublane alignment
    return min(rows, S)


# ----------------------------------------------------------------------------
# Wrapper
# ----------------------------------------------------------------------------
def positional_encoding_forward(x, pe, *, dropout_p=0.1, training=False,
                                rng_key=None, seq_tile=None):
    """x: [seq_len, batch, d_model]; pe: [max_len, 1, >=d_model] buffer."""
    S, B, D = x.shape
    BD = B * D
    itemsize = jnp.dtype(x.dtype).itemsize

    # Lane-dense 2-D views (free row-major reshapes).
    x2 = x.reshape(S, BD)
    # pe[:x.size(0), :, :x.size(2)] broadcast over batch and flattened.
    # NOTE: in a real model cache this slab across calls (depends only on
    # (S, B, D, dtype)); here it is rebuilt per call as wrapper glue.
    pe_flat = jnp.broadcast_to(pe[:S, :, :D].astype(x.dtype),
                               (S, B, D)).reshape(S, BD)

    if seq_tile is None:
        seq_tile = _pick_seq_tile(S, BD * itemsize)
    grid = (pl.cdiv(S, seq_tile),)

    blk = pl.BlockSpec((seq_tile, BD), lambda i: (i, 0))
    out_shape = jax.ShapeDtypeStruct((S, BD), x.dtype)

    use_dropout = bool(training) and dropout_p > 0.0

    # Explicit VMEM budget: (inputs + output) x double-buffer x block + slack,
    # capped so it also fits v7x's 64 MiB physical VMEM.
    n_streams = 4 if use_dropout else 3
    block_bytes = seq_tile * BD * max(itemsize, 4)   # bits stream is uint32
    vmem_limit = int(min(64 << 20,
                         max(2 * n_streams * block_bytes + (4 << 20), 16 << 20)))
    cparams = pltpu.CompilerParams(
        dimension_semantics=("parallel",),   # grid steps independent -> v7x megacore
        vmem_limit_bytes=vmem_limit,
    )

    if use_dropout:
        if rng_key is None:
            rng_key = jax.random.PRNGKey(0)  # callers should thread fresh keys
        # TODO(synk): dropout RNG cannot bit-match torch's RNG; keep-prob and
        # 1/(1-p) inverted-scaling semantics are reproduced exactly.
        bits = jax.random.bits(rng_key, (S, BD), dtype=jnp.uint32)
        threshold = min(int(round(float(dropout_p) * 2.0 ** 32)), 2 ** 32 - 1)
        kernel = functools.partial(_pe_add_dropout_kernel,
                                   threshold=threshold,
                                   scale=1.0 / (1.0 - float(dropout_p)))
        y2 = pl.pallas_call(
            kernel,
            out_shape=out_shape,
            grid=grid,
            in_specs=[blk, blk, blk],
            out_specs=blk,
            compiler_params=cparams,
        )(x2, pe_flat, bits)
    else:
        y2 = pl.pallas_call(
            _pe_add_kernel,
            out_shape=out_shape,
            grid=grid,
            in_specs=[blk, blk],
            out_specs=blk,
            compiler_params=cparams,
        )(x2, pe_flat)

    return y2.reshape(S, B, D)


# ----------------------------------------------------------------------------
# Main
# ----------------------------------------------------------------------------
if __name__ == "__main__":
    seq_len, batch, d_model_orig = 8, 2, 32
    max_len = 64
    dropout_p = 0.1

    key = jax.random.PRNGKey(0)
    x = jax.random.normal(key, (seq_len, batch, d_model_orig), dtype=jnp.float32)
    pe = make_positional_encoding(d_model_orig, max_len=max_len)

    ref = x + pe[:seq_len, :, :d_model_orig]

    # eval-mode path (dropout = identity): check against pure-JAX reference
    y_eval = jax.block_until_ready(
        positional_encoding_forward(x, pe, dropout_p=dropout_p, training=False))
    assert y_eval.shape == x.shape and y_eval.dtype == x.dtype
    assert jnp.allclose(y_eval, ref, atol=1e-6, rtol=1e-6)

    # training-mode path (inverted dropout, integer-threshold mask)
    y_train = jax.block_until_ready(
        positional_encoding_forward(x, pe, dropout_p=dropout_p, training=True,
                                    rng_key=jax.random.PRNGKey(123)))
    assert y_train.shape == x.shape and y_train.dtype == x.dtype
    # surviving elements are exactly ref * 1/(1-p)
    kept = y_train != 0
    expected = ref * jnp.float32(1.0 / (1.0 - dropout_p))
    assert jnp.allclose(jnp.where(kept, y_train, 0.0),
                        jnp.where(kept, expected, 0.0),
                        atol=1e-5, rtol=1e-5)

    print("KERNEL_OK")
</pallas_src>

<mosaic_0001>
module attributes {stable_mosaic.version = 11 : i64} {
  func.func @_pe_add_kernel(%arg0: i32, %arg1: memref<8x64xf32, #tpu.memory_space<vmem>>, %arg2: memref<8x64xf32, #tpu.memory_space<vmem>>, %arg3: memref<8x64xf32, #tpu.memory_space<vmem>>) attributes {dimension_semantics = [#tpu.dimension_semantics<parallel>], iteration_bounds = array<i64: 1>, scalar_prefetch = 0 : i64, scratch_operands = 0 : i64, tpu.core_type = #tpu.core_type<tc>, window_params = [{transform_indices = @transform_0, window_bounds = array<i64: 8, 64>}, {transform_indices = @transform_1, window_bounds = array<i64: 8, 64>}, {transform_indices = @transform_2, window_bounds = array<i64: 8, 64>}]} {
    %c0 = arith.constant 0 : index
    %c0_0 = arith.constant 0 : index
    %0 = vector.load %arg1[%c0, %c0_0] : memref<8x64xf32, #tpu.memory_space<vmem>>, vector<8x64xf32>
    %c0_1 = arith.constant 0 : index
    %c0_2 = arith.constant 0 : index
    %1 = vector.load %arg2[%c0_1, %c0_2] : memref<8x64xf32, #tpu.memory_space<vmem>>, vector<8x64xf32>
    %2 = arith.addf %0, %1 : vector<8x64xf32>
    %c0_3 = arith.constant 0 : index
    %c0_4 = arith.constant 0 : index
    %3 = vector.load %arg3[%c0_3, %c0_4] : memref<8x64xf32, #tpu.memory_space<vmem>>, vector<8x64xf32>
    tpu.vector_store %arg3[%c0_3, %c0_4], %2 {strides = array<i32>} : memref<8x64xf32, #tpu.memory_space<vmem>>, vector<8x64xf32>,
    return
  }
  func.func @transform_0(%arg0: i32) -> (i32, i32) {
    %c0_i32 = arith.constant 0 : i32
    %c0_i32_0 = arith.constant 0 : i32
    return %arg0, %c0_i32 : i32, i32
  }
  func.func @transform_1(%arg0: i32) -> (i32, i32) {
    %c0_i32 = arith.constant 0 : i32
    %c0_i32_0 = arith.constant 0 : i32
    return %arg0, %c0_i32 : i32, i32
  }
  func.func @transform_2(%arg0: i32) -> (i32, i32) {
    %c0_i32 = arith.constant 0 : i32
    %c0_i32_0 = arith.constant 0 : i32
    return %arg0, %c0_i32 : i32, i32
  }
}

</mosaic_0001>

<llo_original>
// kernel: tpu_custom_call.1
$region0: #{tpu_custom_call.1}
  #allocation0 [shape = 'u32[]', space=smem, size = 0x4, offset = 0x4, fixed_abs, tag = 'smem constant byte address 0x4 - core index']
  #allocation1 [shape = 'u32[144,128]{1,0:T(1,128)}', space=vmem, size = 0x12000, scoped, tag = 'internal scratch']
  %s0 = inlined_call_operand.hbm [shape: f32[8,64], index: 0, kind: input, shape index: {}]
  %s1 = inlined_call_operand.hbm [shape: f32[8,64], index: 1, kind: input, shape index: {}]
  %s2 = inlined_call_operand.hbm [shape: f32[8,64], index: 2, kind: output, shape index: {}]
  %s3 = sld [smem:[#allocation0]]
  $region26: #{tpu_custom_call.1} parent=0
    _
  %s5 = ssub.s32 1, %s3
  %s6 = scalar_select 0, %s5, %s3
  $region1: #{tpu_custom_call.1} parent=0
    #allocation2 [shape = 'u8[4096]{0}', space=vmem, size = 0x1000, scoped, tag = 'input window, operand 0, single buffered']
    #allocation3 [shape = 's32[1]{0}', space=sflag, size = 0x4, scoped, tag = 'scoped memory for tpu_custom_call.1']
    #allocation4 [shape = 's32[1]{0}', space=sflag, size = 0x4, scoped, tag = 'scoped memory for tpu_custom_call.1']
    #allocation5 [shape = 'u8[4096]{0}', space=vmem, size = 0x1000, scoped, tag = 'input window, operand 1, single buffered']
    #allocation6 [shape = 's32[1]{0}', space=sflag, size = 0x4, scoped, tag = 'scoped memory for tpu_custom_call.1']
    #allocation7 [shape = 'u8[4096]{0}', space=vmem, size = 0x1000, scoped, tag = 'output window, operand 0, single buffered']
    %7 = vsyncpa [#allocation3], 0
    %8 = vsyncpa [#allocation6], 0
    %9 = vsyncpa [#allocation4], 0
    // Predicated region
    $region2: #{tpu_custom_call.1} parent=1 // pred_check
      _
    $region3: #{tpu_custom_call.1} parent=1 // pred_check_branch
      %11 = sbr.rel (0) target = $region5
    $region4: #{tpu_custom_call.1} parent=1 // pred_region
      %s13 = ssub.s32 128, 128
      %14 = vsyncadd [#allocation3], %s13
      %s16 = sshll.u32 [#allocation2], 4
      %s17 = int_to_ptr.vmem [resolvable:$true] %s16
      %19 = dma.hbm_to_vmem [thread:$0]  %s0, 128, %s17, [#allocation3]
    $region5: #{tpu_custom_call.1} parent=1 // pred_fallthru
      _
    // Predicated region
    $region6: #{tpu_custom_call.1} parent=1 // pred_check
      _
    $region7: #{tpu_custom_call.1} parent=1 // pred_check_branch
      %21 = sbr.rel (0) target = $region9
    $region8: #{tpu_custom_call.1} parent=1 // pred_region
      %s23 = ssub.s32 128, 128
      %24 = vsyncadd [#allocation6], %s23
      %s26 = sshll.u32 [#allocation5], 4
      %s27 = int_to_ptr.vmem [resolvable:$true] %s26
      %29 = dma.hbm_to_vmem [thread:$0]  %s1, 128, %s27, [#allocation6]
    $region9: #{tpu_custom_call.1} parent=1 // pred_fallthru
      _
    // Predicated region
    $region10: #{tpu_custom_call.1} parent=1 // pred_check
      _
    $region11: #{tpu_custom_call.1} parent=1 // pred_check_branch
      %31 = sbr.rel (0) target = $region13
    $region12: #{tpu_custom_call.1} parent=1 // pred_region
      %32 = dma.done [#allocation3], 128
    $region13: #{tpu_custom_call.1} parent=1 // pred_fallthru
      _
    // Predicated region
    $region14: #{tpu_custom_call.1} parent=1 // pred_check
      _
    $region15: #{tpu_custom_call.1} parent=1 // pred_check_branch
      %34 = sbr.rel (0) target = $region17
    $region16: #{tpu_custom_call.1} parent=1 // pred_region
      %35 = dma.done [#allocation6], 128
    $region17: #{tpu_custom_call.1} parent=1 // pred_fallthru
      _
    %v36 = vld [vmem:[#allocation2] sm:$0xff]
    %v37 = vld [vmem:[#allocation5] sm:$0xff]
    %v38 = vadd.f32 %v36, %v37
    %vm39 = vcmask 523264
    %40 = vst.msk [vmem:[#allocation7] sm:$0xff] %vm39, %v38
    // Predicated region
    $region18: #{tpu_custom_call.1} parent=1 // pred_check
      _
    $region19: #{tpu_custom_call.1} parent=1 // pred_check_branch
      %42 = sbr.rel (0) target = $region21
    $region20: #{tpu_custom_call.1} parent=1 // pred_region
      %s44 = ssub.s32 128, 128
      %45 = vsyncadd [#allocation4], %s44
      %s47 = sshll.u32 [#allocation7], 4
      %s48 = int_to_ptr.vmem [resolvable:$true] %s47
      %50 = dma.vmem_to_hbm [thread:$0]  %s48, 128, %s2, [#allocation4]
    $region21: #{tpu_custom_call.1} parent=1 // pred_fallthru
      _
    // Predicated region
    $region22: #{tpu_custom_call.1} parent=1 // pred_check
      _
    $region23: #{tpu_custom_call.1} parent=1 // pred_check_branch
      %52 = sbr.rel (0) target = $region25
    $region24: #{tpu_custom_call.1} parent=1 // pred_region
      %53 = dma.done [#allocation4], 128
    $region25: #{tpu_custom_call.1} parent=1 // pred_fallthru
      _
    %54 = vsyncpa [#allocation3], 1
    %55 = vsyncpa [#allocation6], 1
    %56 = vsyncpa [#allocation4], 1

</llo_original>
